<compile_context>
chip_gen: v5e
topology: v5e:2x2
jax: 0.10.0
libtpu: 0.0.40
codegen_flags: <defaults>
</compile_context>

<pallas_src>
import functools

import jax
import jax.numpy as jnp
from jax.experimental import pallas as pl
from jax.experimental.pallas import tpu as pltpu

LN_EPS = 1e-5  # torch.nn.LayerNorm default


def _round_up(x, m):
    return ((x + m - 1) // m) * m


@functools.lru_cache(maxsize=1)
def _vmem_capacity_bytes():
    try:
        return int(pltpu.get_tpu_info().vmem_capacity_bytes)
    except Exception:
        return 64 * 1024 * 1024  # conservative fallback: v7x has 64 MiB per TC


def _vmem_model(D, in_bytes):
    """(fixed_bytes, per_row_bytes) VMEM footprint model."""
    # Weights single-buffered (pl.Buffered(1)); bias/gamma/beta double-buffered.
    fixed = 2 * D * D * in_bytes + 3 * 2 * D * 4
    # Per row: double-buffered text/image/output blocks + ~6 f32 intermediates
    # (z, gate, fused, centered, norm, out) materialized inside the kernel.
    per_row = D * (2 * 2 * in_bytes + 2 * in_bytes + 6 * 4)
    return fixed, per_row


def _pick_block_rows(M, D, in_bytes):
    """Largest row tile that fits a conservative VMEM budget (incl. f32 temps)."""
    budget = int(_vmem_capacity_bytes() * 0.72)   # headroom for compiler scratch
    fixed, per_row = _vmem_model(D, in_bytes)
    avail = budget - fixed
    rows = avail // per_row if avail > 0 else 16
    rows = int(max(16, min(512, rows)))
    rows = (rows // 16) * 16
    if rows >= 256:
        rows = (rows // 256) * 256                # full MXU-tile multiples (v6e/v7x)
    return rows


def _choose_block_rows(M, D, in_bytes, requested):
    br = requested if requested is not None else _pick_block_rows(M, D, in_bytes)
    br = int(max(1, min(br, M)))
    # v7x has 2 TensorCores: keep >=2 grid steps when a single tile would
    # otherwise cover all rows and there is enough work to split.
    if br >= M and M >= 32:
        br = -(-M // 2)
    if br < M:
        br = max(8, _round_up(br, 8))             # sublane alignment for partial tiles
        if br >= M:
            br = M
    return br


def _gating_kernel(t_ref, i_ref, w1_ref, w2_ref, b_ref, g_ref, beta_ref, o_ref,
                   *, inv_d, precision):
    # MXU matmuls in the input dtype (bf16 stays bf16), f32 accumulation.
    t = t_ref[...]                                    # (tm, D)
    im = i_ref[...]                                   # (tm, D)
    z = (jnp.dot(t, w1_ref[...], preferred_element_type=jnp.float32,
                 precision=precision)
         + jnp.dot(im, w2_ref[...], preferred_element_type=jnp.float32,
                   precision=precision)
         + b_ref[...])                                # bias added once, post-accum (f32)

    gate = jax.nn.sigmoid(z)                          # EUP
    t32 = t.astype(jnp.float32)
    i32 = im.astype(jnp.float32)
    fused = i32 + gate * (t32 - i32)                  # == gate*t + (1-gate)*i

    # TODO(synk): Dropout omitted (inference identity); training parity would
    # need pltpu.prng_seed / pltpu.prng_random_bits masking.

    # One-sweep LayerNorm statistics: E[x], E[x^2]; no lane padding -> no mask.
    mean = jnp.sum(fused, axis=-1, keepdims=True) * inv_d
    ex2 = jnp.sum(fused * fused, axis=-1, keepdims=True) * inv_d
    var = jnp.maximum(ex2 - mean * mean, 0.0)
    norm = (fused - mean) * jax.lax.rsqrt(var + LN_EPS)
    o_ref[...] = (norm * g_ref[...] + beta_ref[...]).astype(o_ref.dtype)


def prepare_gating_params(weight_t, bias, gamma, beta, compute_dtype):
    """Pre-pack params once (hoisted out of the per-call forward path).

    weight_t: (2D, D) = torch gate_fc.weight (shape (D, 2D)) transposed.
    Returns (w1, w2, b2, g2, be2) ready for dynamic_gating().
    """
    D = weight_t.shape[1]
    w1 = weight_t[:D, :].astype(compute_dtype)        # text half of W.T
    w2 = weight_t[D:, :].astype(compute_dtype)        # image half of W.T
    b2 = bias.astype(jnp.float32).reshape(1, D)
    g2 = gamma.astype(jnp.float32).reshape(1, D)      # LayerNorm weight
    be2 = beta.astype(jnp.float32).reshape(1, D)      # LayerNorm bias
    return w1, w2, b2, g2, be2


@functools.partial(jax.jit, static_argnames=("block_rows",))
def _dynamic_gating_impl(text, image, w1, w2, b2, g2, be2, block_rows=None):
    B, S, D = text.shape
    M = B * S
    in_dt = text.dtype
    in_bytes = jnp.dtype(in_dt).itemsize

    br = _choose_block_rows(M, D, in_bytes, block_rows)
    grid = (pl.cdiv(M, br),)                          # partial last block is masked

    # Free reshapes only: no padding, no output slice -> no extra HBM traffic.
    t2 = text.reshape(M, D)
    i2 = image.reshape(M, D)

    row_spec = pl.BlockSpec((br, D), lambda i: (i, 0))
    # Invariant weights: constant index_map (DMA'd once); single buffer halves
    # their VMEM footprint.
    mat_spec = pl.BlockSpec((D, D), lambda i: (0, 0), pipeline_mode=pl.Buffered(1))
    vec_spec = pl.BlockSpec((1, D), lambda i: (0, 0))

    fixed, per_row = _vmem_model(D, in_bytes)
    needed = fixed + per_row * br + (4 << 20)         # + headroom
    vmem_limit = int(min(max(needed, 32 << 20),
                         int(_vmem_capacity_bytes() * 0.85)))

    cost = pl.CostEstimate(
        flops=4 * M * D * D + 10 * M * D,
        transcendentals=M * D,                        # sigmoid (+ per-row rsqrt)
        bytes_accessed=(3 * M * D * in_bytes          # text + image + output
                        + 2 * D * D * in_bytes        # W1 + W2
                        + 3 * D * 4),                 # bias/gamma/beta
    )

    precision = jax.lax.Precision.HIGHEST if in_dt == jnp.float32 else None
    kernel = functools.partial(_gating_kernel, inv_d=1.0 / D, precision=precision)

    # TODO(synk): for very large D (2*D^2*in_bytes approaching the VMEM budget
    # even single-buffered), add a K-tiled "arbitrary" grid axis with an f32
    # accumulator scratch so weight VMEM stays bounded.
    out = pl.pallas_call(
        kernel,
        out_shape=jax.ShapeDtypeStruct((M, D), in_dt),
        grid_spec=pltpu.PrefetchScalarGridSpec(
            num_scalar_prefetch=0,
            grid=grid,
            in_specs=[row_spec, row_spec, mat_spec, mat_spec,
                      vec_spec, vec_spec, vec_spec],
            out_specs=row_spec,
        ),
        compiler_params=pltpu.CompilerParams(
            dimension_semantics=("parallel",),
            vmem_limit_bytes=vmem_limit,
        ),
        cost_estimate=cost,
    )(t2, i2, w1, w2, b2, g2, be2)

    return out.reshape(B, S, D)


def dynamic_gating(text, image, w1, w2, b2, g2, be2, block_rows=None):
    """DynamicGating.forward. If image_features is None, returns text_features."""
    if image is None:
        return text
    return _dynamic_gating_impl(text, image, w1, w2, b2, g2, be2,
                                block_rows=block_rows)


def _reference(text, image, weight_t, bias, gamma, beta):
    combined = jnp.concatenate([text, image], axis=-1)
    gate = jax.nn.sigmoid(combined @ weight_t + bias)
    fused = gate * text + (1.0 - gate) * image
    mean = jnp.mean(fused, axis=-1, keepdims=True)
    var = jnp.mean((fused - mean) ** 2, axis=-1, keepdims=True)
    return (fused - mean) * jax.lax.rsqrt(var + LN_EPS) * gamma + beta


if __name__ == "__main__":
    B, S, D = 2, 8, 32
    key = jax.random.PRNGKey(0)
    k_t, k_i, k_w, k_b = jax.random.split(key, 4)

    text = jax.random.normal(k_t, (B, S, D), dtype=jnp.float32)
    image = jax.random.normal(k_i, (B, S, D), dtype=jnp.float32)

    # Deterministic parameter init (matches torch Linear's U(-1/sqrt(fan_in), ..) scale).
    fan_in = 2 * D
    bound = 1.0 / (fan_in ** 0.5)
    weight_t = jax.random.uniform(k_w, (2 * D, D), jnp.float32, -bound, bound)
    bias = jax.random.uniform(k_b, (D,), jnp.float32, -bound, bound)
    gamma = jnp.ones((D,), jnp.float32)   # LayerNorm weight
    beta = jnp.zeros((D,), jnp.float32)   # LayerNorm bias

    ref = _reference(text, image, weight_t, bias, gamma, beta)

    # Params pre-packed once (hoisted out of the forward path).
    params = prepare_gating_params(weight_t, bias, gamma, beta,
                                   compute_dtype=text.dtype)

    # Auto-tiled path.
    out = dynamic_gating(text, image, *params)
    out = jax.block_until_ready(out)
    assert out.shape == (B, S, D)
    assert jnp.allclose(out, ref, atol=1e-4, rtol=1e-4), "mismatch vs reference (auto tile)"

    # Multi-step grid path (block_rows < M, exercises the pipelined row grid).
    out2 = dynamic_gating(text, image, *params, block_rows=8)
    out2 = jax.block_until_ready(out2)
    assert jnp.allclose(out2, ref, atol=1e-4, rtol=1e-4), "mismatch vs reference (tiled)"

    # image_features is None -> module returns text_features unchanged.
    assert dynamic_gating(text, None, *params) is text

    print("KERNEL_OK")
</pallas_src>

<mosaic_0001>
module attributes {stable_mosaic.version = 11 : i64} {
  func.func @_gating_kernel(%arg0: i32, %arg1: memref<16x32xf32, #tpu.memory_space<vmem>>, %arg2: memref<16x32xf32, #tpu.memory_space<vmem>>, %arg3: memref<32x32xf32, #tpu.memory_space<vmem>>, %arg4: memref<32x32xf32, #tpu.memory_space<vmem>>, %arg5: memref<1x32xf32, #tpu.memory_space<vmem>>, %arg6: memref<1x32xf32, #tpu.memory_space<vmem>>, %arg7: memref<1x32xf32, #tpu.memory_space<vmem>>, %arg8: memref<16x32xf32, #tpu.memory_space<vmem>>) attributes {dimension_semantics = [#tpu.dimension_semantics<parallel>], iteration_bounds = array<i64: 1>, scalar_prefetch = 0 : i64, scratch_operands = 0 : i64, tpu.core_type = #tpu.core_type<tc>, window_params = [{transform_indices = @transform_0, window_bounds = array<i64: 16, 32>}, {transform_indices = @transform_1, window_bounds = array<i64: 16, 32>}, {pipeline_mode = #tpu.pipeline_mode<synchronous>, transform_indices = @transform_2, window_bounds = array<i64: 32, 32>}, {pipeline_mode = #tpu.pipeline_mode<synchronous>, transform_indices = @transform_3, window_bounds = array<i64: 32, 32>}, {pipeline_mode = #tpu.pipeline_mode<synchronous>, transform_indices = @transform_4, window_bounds = array<i64: 1, 32>}, {pipeline_mode = #tpu.pipeline_mode<synchronous>, transform_indices = @transform_5, window_bounds = array<i64: 1, 32>}, {pipeline_mode = #tpu.pipeline_mode<synchronous>, transform_indices = @transform_6, window_bounds = array<i64: 1, 32>}, {transform_indices = @transform_7, window_bounds = array<i64: 16, 32>}]} {
    %c0 = arith.constant 0 : index
    %c0_0 = arith.constant 0 : index
    %0 = vector.load %arg1[%c0, %c0_0] : memref<16x32xf32, #tpu.memory_space<vmem>>, vector<16x32xf32>
    %c0_1 = arith.constant 0 : index
    %c0_2 = arith.constant 0 : index
    %1 = vector.load %arg2[%c0_1, %c0_2] : memref<16x32xf32, #tpu.memory_space<vmem>>, vector<16x32xf32>
    %c0_3 = arith.constant 0 : index
    %c0_4 = arith.constant 0 : index
    %2 = vector.load %arg3[%c0_3, %c0_4] : memref<32x32xf32, #tpu.memory_space<vmem>>, vector<32x32xf32>
    %cst = arith.constant dense<0.000000e+00> : vector<16x32xf32>
    %3 = tpu.matmul %0, %2, %cst {dimension_numbers = #tpu.dot_dimension_numbers<[1], [0], [0], [1], [0, 0, 1, 1], [], []>, precision = #tpu.contract_precision<fp32>} : vector<16x32xf32>, vector<32x32xf32>, vector<16x32xf32> -> vector<16x32xf32>
    %c0_5 = arith.constant 0 : index
    %c0_6 = arith.constant 0 : index
    %4 = vector.load %arg4[%c0_5, %c0_6] : memref<32x32xf32, #tpu.memory_space<vmem>>, vector<32x32xf32>
    %cst_7 = arith.constant dense<0.000000e+00> : vector<16x32xf32>
    %5 = tpu.matmul %1, %4, %cst_7 {dimension_numbers = #tpu.dot_dimension_numbers<[1], [0], [0], [1], [0, 0, 1, 1], [], []>, precision = #tpu.contract_precision<fp32>} : vector<16x32xf32>, vector<32x32xf32>, vector<16x32xf32> -> vector<16x32xf32>
    %6 = arith.addf %3, %5 : vector<16x32xf32>
    %c0_8 = arith.constant 0 : index
    %c0_9 = arith.constant 0 : index
    %7 = vector.load %arg5[%c0_8, %c0_9] : memref<1x32xf32, #tpu.memory_space<vmem>>, vector<1x32xf32>
    %8 = vector.broadcast %7 : vector<1x32xf32> to vector<16x32xf32>
    %9 = arith.addf %6, %8 : vector<16x32xf32>
    %10 = arith.negf %9 : vector<16x32xf32>
    %11 = math.exp %10 : vector<16x32xf32>
    %cst_10 = arith.constant 1.000000e+00 : f32
    %12 = vector.broadcast %cst_10 : f32 to vector<16x32xf32>
    %13 = arith.addf %12, %11 : vector<16x32xf32>
    %14 = arith.divf %12, %13 : vector<16x32xf32>
    %15 = arith.subf %0, %1 : vector<16x32xf32>
    %16 = arith.mulf %14, %15 : vector<16x32xf32>
    %17 = arith.addf %1, %16 : vector<16x32xf32>
    %cst_11 = arith.constant dense<0.000000e+00> : vector<16xf32>
    %18 = vector.multi_reduction <add>, %17, %cst_11 [1] : vector<16x32xf32> to vector<16xf32>
    %19 = vector.shape_cast %18 : vector<16xf32> to vector<16x1xf32>
    %cst_12 = arith.constant 3.125000e-02 : f32
    %20 = vector.broadcast %cst_12 : f32 to vector<16x1xf32>
    %21 = arith.mulf %19, %20 : vector<16x1xf32>
    %22 = arith.mulf %17, %17 : vector<16x32xf32>
    %cst_13 = arith.constant dense<0.000000e+00> : vector<16xf32>
    %23 = vector.multi_reduction <add>, %22, %cst_13 [1] : vector<16x32xf32> to vector<16xf32>
    %24 = vector.shape_cast %23 : vector<16xf32> to vector<16x1xf32>
    %cst_14 = arith.constant 3.125000e-02 : f32
    %25 = vector.broadcast %cst_14 : f32 to vector<16x1xf32>
    %26 = arith.mulf %24, %25 : vector<16x1xf32>
    %27 = arith.mulf %21, %21 : vector<16x1xf32>
    %28 = arith.subf %26, %27 : vector<16x1xf32>
    %cst_15 = arith.constant 0.000000e+00 : f32
    %29 = vector.broadcast %cst_15 : f32 to vector<16x1xf32>
    %30 = arith.maximumf %28, %29 : vector<16x1xf32>
    %31 = vector.broadcast %21 : vector<16x1xf32> to vector<16x32xf32>
    %32 = arith.subf %17, %31 : vector<16x32xf32>
    %cst_16 = arith.constant 9.99999974E-6 : f32
    %33 = vector.broadcast %cst_16 : f32 to vector<16x1xf32>
    %34 = arith.addf %30, %33 : vector<16x1xf32>
    %35 = math.rsqrt %34 : vector<16x1xf32>
    %36 = vector.broadcast %35 : vector<16x1xf32> to vector<16x32xf32>
    %37 = arith.mulf %32, %36 : vector<16x32xf32>
    %c0_17 = arith.constant 0 : index
    %c0_18 = arith.constant 0 : index
    %38 = vector.load %arg6[%c0_17, %c0_18] : memref<1x32xf32, #tpu.memory_space<vmem>>, vector<1x32xf32>
    %39 = vector.broadcast %38 : vector<1x32xf32> to vector<16x32xf32>
    %40 = arith.mulf %37, %39 : vector<16x32xf32>
    %c0_19 = arith.constant 0 : index
    %c0_20 = arith.constant 0 : index
    %41 = vector.load %arg7[%c0_19, %c0_20] : memref<1x32xf32, #tpu.memory_space<vmem>>, vector<1x32xf32>
    %42 = vector.broadcast %41 : vector<1x32xf32> to vector<16x32xf32>
    %43 = arith.addf %40, %42 : vector<16x32xf32>
    %c0_21 = arith.constant 0 : index
    %c0_22 = arith.constant 0 : index
    %44 = vector.load %arg8[%c0_21, %c0_22] : memref<16x32xf32, #tpu.memory_space<vmem>>, vector<16x32xf32>
    tpu.vector_store %arg8[%c0_21, %c0_22], %43 {strides = array<i32>} : memref<16x32xf32, #tpu.memory_space<vmem>>, vector<16x32xf32>,
    return
  }
  func.func @transform_0(%arg0: i32) -> (i32, i32) {
    %c0_i32 = arith.constant 0 : i32
    %c0_i32_0 = arith.constant 0 : i32
    return %arg0, %c0_i32 : i32, i32
  }
  func.func @transform_1(%arg0: i32) -> (i32, i32) {
    %c0_i32 = arith.constant 0 : i32
    %c0_i32_0 = arith.constant 0 : i32
    return %arg0, %c0_i32 : i32, i32
  }
  func.func @transform_2(%arg0: i32) -> (i32, i32) {
    %c0_i32 = arith.constant 0 : i32
    %c0_i32_0 = arith.constant 0 : i32
    %c0_i32_1 = arith.constant 0 : i32
    return %c0_i32, %c0_i32_0 : i32, i32
  }
  func.func @transform_3(%arg0: i32) -> (i32, i32) {
    %c0_i32 = arith.constant 0 : i32
    %c0_i32_0 = arith.constant 0 : i32
    %c0_i32_1 = arith.constant 0 : i32
    return %c0_i32, %c0_i32_0 : i32, i32
  }
  func.func @transform_4(%arg0: i32) -> (i32, i32) {
    %c0_i32 = arith.constant 0 : i32
    %c0_i32_0 = arith.constant 0 : i32
    %c0_i32_1 = arith.constant 0 : i32
    return %c0_i32, %c0_i32_0 : i32, i32
  }
  func.func @transform_5(%arg0: i32) -> (i32, i32) {
    %c0_i32 = arith.constant 0 : i32
    %c0_i32_0 = arith.constant 0 : i32
    %c0_i32_1 = arith.constant 0 : i32
    return %c0_i32, %c0_i32_0 : i32, i32
  }
  func.func @transform_6(%arg0: i32) -> (i32, i32) {
    %c0_i32 = arith.constant 0 : i32
    %c0_i32_0 = arith.constant 0 : i32
    %c0_i32_1 = arith.constant 0 : i32
    return %c0_i32, %c0_i32_0 : i32, i32
  }
  func.func @transform_7(%arg0: i32) -> (i32, i32) {
    %c0_i32 = arith.constant 0 : i32
    %c0_i32_0 = arith.constant 0 : i32
    return %arg0, %c0_i32 : i32, i32
  }
}

</mosaic_0001>

<llo_original>
// kernel: _dynamic_gating_impl.1
$region0: #{_dynamic_gating_impl.1}
  #allocation0 [shape = 'u32[]', space=smem, size = 0x4, offset = 0x4, fixed_abs, tag = 'smem constant byte address 0x4 - core index']
  #allocation1 [shape = 'u32[72,128]{1,0:T(1,128)}', space=vmem, size = 0x9000, scoped, tag = 'internal scratch']
  %s0 = inlined_call_operand.hbm [shape: f32[16,32], index: 0, kind: input, shape index: {}]
  %s1 = inlined_call_operand.hbm [shape: f32[16,32], index: 1, kind: input, shape index: {}]
  %s2 = inlined_call_operand.hbm [shape: f32[32,32], index: 2, kind: input, shape index: {}]
  %s3 = inlined_call_operand.hbm [shape: f32[32,32], index: 3, kind: input, shape index: {}]
  %s4 = inlined_call_operand.vmem [shape: f32[1,32], index: 4, kind: input, shape index: {}]
  %s5 = inlined_call_operand.vmem [shape: f32[1,32], index: 5, kind: input, shape index: {}]
  %s6 = inlined_call_operand.vmem [shape: f32[1,32], index: 6, kind: input, shape index: {}]
  %s7 = inlined_call_operand.hbm [shape: f32[16,32], index: 7, kind: output, shape index: {}]
  %s8 = sld [smem:[#allocation0]]
  $region54: #{_dynamic_gating_impl.1} parent=0
    _
  %s10 = ssub.s32 1, %s8
  %s11 = scalar_select 0, %s10, %s8
  $region1: #{_dynamic_gating_impl.1} parent=0
    #allocation2 [shape = 'u8[8192]{0}', space=vmem, size = 0x2000, scoped, tag = 'input window, operand 0, single buffered']
    #allocation3 [shape = 's32[1]{0}', space=sflag, size = 0x4, scoped, tag = 'scoped memory for _dynamic_gating_impl.1']
    #allocation4 [shape = 's32[1]{0}', space=sflag, size = 0x4, scoped, tag = 'scoped memory for _dynamic_gating_impl.1']
    #allocation5 [shape = 'u8[8192]{0}', space=vmem, size = 0x2000, scoped, tag = 'input window, operand 1, single buffered']
    #allocation6 [shape = 's32[1]{0}', space=sflag, size = 0x4, scoped, tag = 'scoped memory for _dynamic_gating_impl.1']
    #allocation7 [shape = 'u8[16384]{0}', space=vmem, size = 0x4000, scoped, tag = 'input window, operand 2, single buffered']
    #allocation8 [shape = 'u8[16384]{0}', space=vmem, size = 0x4000, scoped, tag = 'input window, operand 3, single buffered']
    #allocation9 [shape = 's32[1]{0}', space=sflag, size = 0x4, scoped, tag = 'scoped memory for _dynamic_gating_impl.1']
    #allocation10 [shape = 'u8[8192]{0}', space=vmem, size = 0x2000, scoped, tag = 'output window, operand 0, single buffered']
    %12 = vsyncpa [#allocation3], 0
    %13 = vsyncpa [#allocation6], 0
    %14 = vsyncpa [#allocation9], 0
    %15 = vsyncpa [#allocation4], 0
    // Predicated region
    $region2: #{_dynamic_gating_impl.1} parent=1 // pred_check
      _
    $region3: #{_dynamic_gating_impl.1} parent=1 // pred_check_branch
      %17 = sbr.rel (0) target = $region5
    $region4: #{_dynamic_gating_impl.1} parent=1 // pred_region
      %19 = vsyncadd [#allocation3], 0
      %s20 = sshll.u32 %s0, 4
      %s21 = int_to_ptr.hbm [resolvable:$true] %s20
      %s22 = sshll.u32 [#allocation2], 4
      %s23 = int_to_ptr.vmem [resolvable:$true] %s22
      %28 = dma.hbm_to_vmem [thread:$0]  %s21, 256, %s23, [#allocation3], 128, 128, 8
    $region5: #{_dynamic_gating_impl.1} parent=1 // pred_fallthru
      _
    // Predicated region
    $region6: #{_dynamic_gating_impl.1} parent=1 // pred_check
      _
    $region7: #{_dynamic_gating_impl.1} parent=1 // pred_check_branch
      %30 = sbr.rel (0) target = $region9
    $region8: #{_dynamic_gating_impl.1} parent=1 // pred_region
      %32 = vsyncadd [#allocation6], 0
      %s33 = sshll.u32 %s1, 4
      %s34 = int_to_ptr.hbm [resolvable:$true] %s33
      %s35 = sshll.u32 [#allocation5], 4
      %s36 = int_to_ptr.vmem [resolvable:$true] %s35
      %41 = dma.hbm_to_vmem [thread:$0]  %s34, 256, %s36, [#allocation6], 128, 128, 8
    $region9: #{_dynamic_gating_impl.1} parent=1 // pred_fallthru
      _
    // Predicated region
    $region10: #{_dynamic_gating_impl.1} parent=1 // pred_check
      _
    $region11: #{_dynamic_gating_impl.1} parent=1 // pred_check_branch
      %43 = sbr.rel (0) target = $region13
    $region12: #{_dynamic_gating_impl.1} parent=1 // pred_region
      %45 = vsyncadd [#allocation6], 0
      %s46 = sshll.u32 %s2, 4
      %s47 = int_to_ptr.hbm [resolvable:$true] %s46
      %s48 = sshll.u32 [#allocation7], 4
      %s49 = int_to_ptr.vmem [resolvable:$true] %s48
      %54 = dma.hbm_to_vmem [thread:$0]  %s47, 512, %s49, [#allocation6], 128, 128, 8
    $region13: #{_dynamic_gating_impl.1} parent=1 // pred_fallthru
      _
    // Predicated region
    $region14: #{_dynamic_gating_impl.1} parent=1 // pred_check
      _
    $region15: #{_dynamic_gating_impl.1} parent=1 // pred_check_branch
      %56 = sbr.rel (0) target = $region17
    $region16: #{_dynamic_gating_impl.1} parent=1 // pred_region
      %58 = vsyncadd [#allocation9], 0
      %s59 = sshll.u32 %s3, 4
      %s60 = int_to_ptr.hbm [resolvable:$true] %s59
      %s61 = sshll.u32 [#allocation8], 4
      %s62 = int_to_ptr.vmem [resolvable:$true] %s61
      %67 = dma.hbm_to_vmem [thread:$0]  %s60, 512, %s62, [#allocation9], 128, 128, 8
    $region17: #{_dynamic_gating_impl.1} parent=1 // pred_fallthru
      _
    // Predicated region
    $region18: #{_dynamic_gating_impl.1} parent=1 // pred_check
      _
    $region19: #{_dynamic_gating_impl.1} parent=1 // pred_check_branch
      %69 = sbr.rel (0) target = $region21
    $region20: #{_dynamic_gating_impl.1} parent=1 // pred_region
      _
    $region21: #{_dynamic_gating_impl.1} parent=1 // pred_fallthru
      _
    // Predicated region
    $region22: #{_dynamic_gating_impl.1} parent=1 // pred_check
      _
    $region23: #{_dynamic_gating_impl.1} parent=1 // pred_check_branch
      %71 = sbr.rel (0) target = $region25
    $region24: #{_dynamic_gating_impl.1} parent=1 // pred_region
      _
    $region25: #{_dynamic_gating_impl.1} parent=1 // pred_fallthru
      _
    // Predicated region
    $region26: #{_dynamic_gating_impl.1} parent=1 // pred_check
      _
    $region27: #{_dynamic_gating_impl.1} parent=1 // pred_check_branch
      %73 = sbr.rel (0) target = $region29
    $region28: #{_dynamic_gating_impl.1} parent=1 // pred_region
      _
    $region29: #{_dynamic_gating_impl.1} parent=1 // pred_fallthru
      _
    // Predicated region
    $region30: #{_dynamic_gating_impl.1} parent=1 // pred_check
      _
    $region31: #{_dynamic_gating_impl.1} parent=1 // pred_check_branch
      %75 = sbr.rel (0) target = $region33
    $region32: #{_dynamic_gating_impl.1} parent=1 // pred_region
      %77 = dma.done [#allocation3], 256
    $region33: #{_dynamic_gating_impl.1} parent=1 // pred_fallthru
      _
    // Predicated region
    $region34: #{_dynamic_gating_impl.1} parent=1 // pred_check
      _
    $region35: #{_dynamic_gating_impl.1} parent=1 // pred_check_branch
      %79 = sbr.rel (0) target = $region37
    $region36: #{_dynamic_gating_impl.1} parent=1 // pred_region
      %81 = dma.done [#allocation6], 256
    $region37: #{_dynamic_gating_impl.1} parent=1 // pred_fallthru
      _
    // Predicated region
    $region38: #{_dynamic_gating_impl.1} parent=1 // pred_check
      _
    $region39: #{_dynamic_gating_impl.1} parent=1 // pred_check_branch
      %83 = sbr.rel (0) target = $region41
    $region40: #{_dynamic_gating_impl.1} parent=1 // pred_region
      %85 = dma.done [#allocation6], 512
    $region41: #{_dynamic_gating_impl.1} parent=1 // pred_fallthru
      _
    // Predicated region
    $region42: #{_dynamic_gating_impl.1} parent=1 // pred_check
      _
    $region43: #{_dynamic_gating_impl.1} parent=1 // pred_check_branch
      %87 = sbr.rel (0) target = $region45
    $region44: #{_dynamic_gating_impl.1} parent=1 // pred_region
      %89 = dma.done [#allocation9], 512
    $region45: #{_dynamic_gating_impl.1} parent=1 // pred_fallthru
      _
    %v90 = vld [vmem:[#allocation2] sm:$0xff]
    %v91 = vld [vmem:[#allocation2 + $0x8] sm:$0xff]
    %v92 = vld [vmem:[#allocation5] sm:$0xff]
    %v93 = vld [vmem:[#allocation5 + $0x8] sm:$0xff]
    %v94 = vld [vmem:[#allocation7] sm:$0xff]
    %v95 = vld [vmem:[#allocation7 + $0x8] sm:$0xff]
    %v96 = vld [vmem:[#allocation7 + $0x10] sm:$0xff]
    %v97 = vld [vmem:[#allocation7 + $0x18] sm:$0xff]
    %v98 = vld [vmem:[#allocation8] sm:$0xff]
    %v99 = vld [vmem:[#allocation8 + $0x8] sm:$0xff]
    %v100 = vld [vmem:[#allocation8 + $0x10] sm:$0xff]
    %v101 = vld [vmem:[#allocation8 + $0x18] sm:$0xff]
    %vm102 = vcmask 261120
    %v104 = vsel %vm102, %v92, 0
    %v107 = vsel %vm102, %v93, 0
    %109 = vmatpush.msra.mxu0 0.0
    %110 = vmatpush.msra.mxu0 0.0
    %111 = vmatpush.msra.mxu0 0.0
    %112 = vmatpush.msra.mxu0 0.0
    %113 = vmatpush.msra.mxu0 0.0
    %114 = vmatpush.msra.mxu0 0.0
    %115 = vmatpush.msra.mxu0 0.0
    %116 = vmatpush.msra.mxu0 0.0
    %117 = vmatpush.msra.mxu0 0.0
    %118 = vmatpush.msra.mxu0 0.0
    %119 = vmatpush.msra.mxu0 0.0
    %120 = vmatpush.msra.mxu0 0.0
    %v121 = vand.u32 %v101, 4294901760
    %122 = vmatpush.msra.mxu0 %v121
    %v123 = vand.u32 %v100, 4294901760
    %124 = vmatpush.msra.mxu0 %v123
    %v125 = vand.u32 %v99, 4294901760
    %126 = vmatpush.msra.mxu0 %v125
    %v127 = vand.u32 %v98, 4294901760
    %128 = vmatpush.msra.mxu0 %v127
    %v129 = vand.u32 %v104, 4294901760
    %v130 = vsub.f32 %v104, %v129
    %v131 = vand.u32 %v130, 4294901760
    %v132 = vsub.f32 %v130, %v131
    %v133 = vand.u32 %v132, 4294901760
    %134 = vmatmul.f32.gmra.mxu0 %v133
    %v135 = vpop.f32.mrf.mxu0
    %v136 = vadd.f32 0.0, %v135
    %v137 = vand.u32 %v107, 4294901760
    %v138 = vsub.f32 %v107, %v137
    %v139 = vand.u32 %v138, 4294901760
    %v140 = vsub.f32 %v138, %v139
    %v141 = vand.u32 %v140, 4294901760
    %142 = vmatmul.f32.gmra.mxu0 %v141
    %v143 = vpop.f32.mrf.mxu0
    %v144 = vadd.f32 0.0, %v143
    %145 = vdwg.mxu0
    %146 = vmatpush.msra.mxu0 0.0
    %147 = vmatpush.msra.mxu0 0.0
    %148 = vmatpush.msra.mxu0 0.0
    %149 = vmatpush.msra.mxu0 0.0
    %150 = vmatpush.msra.mxu0 0.0
    %151 = vmatpush.msra.mxu0 0.0
    %152 = vmatpush.msra.mxu0 0.0
    %153 = vmatpush.msra.mxu0 0.0
    %154 = vmatpush.msra.mxu0 0.0
    %155 = vmatpush.msra.mxu0 0.0
    %156 = vmatpush.msra.mxu0 0.0
    %157 = vmatpush.msra.mxu0 0.0
    %v158 = vand.u32 %v101, 4294901760
    %v159 = vsub.f32 %v101, %v158
    %v160 = vand.u32 %v159, 4294901760
    %v161 = vsub.f32 %v159, %v160
    %v162 = vand.u32 %v161, 4294901760
    %163 = vmatpush.msra.mxu0 %v162
    %v164 = vand.u32 %v100, 4294901760
    %v165 = vsub.f32 %v100, %v164
    %v166 = vand.u32 %v165, 4294901760
    %v167 = vsub.f32 %v165, %v166
    %v168 = vand.u32 %v167, 4294901760
    %169 = vmatpush.msra.mxu0 %v168
    %v170 = vand.u32 %v99, 4294901760
    %v171 = vsub.f32 %v99, %v170
    %v172 = vand.u32 %v171, 4294901760
    %v173 = vsub.f32 %v171, %v172
    %v174 = vand.u32 %v173, 4294901760
    %175 = vmatpush.msra.mxu0 %v174
    %v176 = vand.u32 %v98, 4294901760
    %v177 = vsub.f32 %v98, %v176
    %v178 = vand.u32 %v177, 4294901760
    %v179 = vsub.f32 %v177, %v178
    %v180 = vand.u32 %v179, 4294901760
    %181 = vmatpush.msra.mxu0 %v180
    %v182 = vand.u32 %v104, 4294901760
    %183 = vmatmul.f32.gmra.mxu0 %v182
    %v184 = vpop.f32.mrf.mxu0
    %v185 = vadd.f32 %v136, %v184
    %v186 = vand.u32 %v107, 4294901760
    %187 = vmatmul.f32.gmra.mxu0 %v186
    %v188 = vpop.f32.mrf.mxu0
    %v189 = vadd.f32 %v144, %v188
    %190 = vdwg.mxu0
    %191 = vmatpush.msra.mxu0 0.0
    %192 = vmatpush.msra.mxu0 0.0
    %193 = vmatpush.msra.mxu0 0.0
    %194 = vmatpush.msra.mxu0 0.0
    %195 = vmatpush.msra.mxu0 0.0
    %196 = vmatpush.msra.mxu0 0.0
    %197 = vmatpush.msra.mxu0 0.0
    %198 = vmatpush.msra.mxu0 0.0
    %199 = vmatpush.msra.mxu0 0.0
    %200 = vmatpush.msra.mxu0 0.0
    %201 = vmatpush.msra.mxu0 0.0
    %202 = vmatpush.msra.mxu0 0.0
    %v203 = vand.u32 %v101, 4294901760
    %v204 = vsub.f32 %v101, %v203
    %205 = vmatpush.msra.mxu0 %v204
    %v206 = vand.u32 %v100, 4294901760
    %v207 = vsub.f32 %v100, %v206
    %208 = vmatpush.msra.mxu0 %v207
    %v209 = vand.u32 %v99, 4294901760
    %v210 = vsub.f32 %v99, %v209
    %211 = vmatpush.msra.mxu0 %v210
    %v212 = vand.u32 %v98, 4294901760
    %v213 = vsub.f32 %v98, %v212
    %214 = vmatpush.msra.mxu0 %v213
    %v215 = vand.u32 %v104, 4294901760
    %v216 = vsub.f32 %v104, %v215
    %217 = vmatmul.f32.gmra.mxu0 %v216
    %v218 = vpop.f32.mrf.mxu0
    %v219 = vadd.f32 %v185, %v218
    %v220 = vand.u32 %v107, 4294901760
    %v221 = vsub.f32 %v107, %v220
    %222 = vmatmul.f32.gmra.mxu0 %v221
    %v223 = vpop.f32.mrf.mxu0
    %v224 = vadd.f32 %v189, %v223
    %225 = vdwg.mxu0
    %226 = vmatpush.msra.mxu0 0.0
    %227 = vmatpush.msra.mxu0 0.0
    %228 = vmatpush.msra.mxu0 0.0
    %229 = vmatpush.msra.mxu0 0.0
    %230 = vmatpush.msra.mxu0 0.0
    %231 = vmatpush.msra.mxu0 0.0
    %232 = vmatpush.msra.mxu0 0.0
    %233 = vmatpush.msra.mxu0 0.0
    %234 = vmatpush.msra.mxu0 0.0
    %235 = vmatpush.msra.mxu0 0.0
    %236 = vmatpush.msra.mxu0 0.0
    %237 = vmatpush.msra.mxu0 0.0
    %v238 = vand.u32 %v101, 4294901760
    %239 = vmatpush.msra.mxu0 %v238
    %v240 = vand.u32 %v100, 4294901760
    %241 = vmatpush.msra.mxu0 %v240
    %v242 = vand.u32 %v99, 4294901760
    %243 = vmatpush.msra.mxu0 %v242
    %v244 = vand.u32 %v98, 4294901760
    %245 = vmatpush.msra.mxu0 %v244
    %v246 = vand.u32 %v104, 4294901760
    %v247 = vsub.f32 %v104, %v246
    %v248 = vand.u32 %v247, 4294901760
    %249 = vmatmul.f32.gmra.mxu0 %v248
    %v250 = vpop.f32.mrf.mxu0
    %v251 = vadd.f32 %v219, %v250
    %v252 = vand.u32 %v107, 4294901760
    %v253 = vsub.f32 %v107, %v252
    %v254 = vand.u32 %v253, 4294901760
    %255 = vmatmul.f32.gmra.mxu0 %v254
    %v256 = vpop.f32.mrf.mxu0
    %v257 = vadd.f32 %v224, %v256
    %258 = vdwg.mxu0
    %259 = vmatpush.msra.mxu0 0.0
    %260 = vmatpush.msra.mxu0 0.0
    %261 = vmatpush.msra.mxu0 0.0
    %262 = vmatpush.msra.mxu0 0.0
    %263 = vmatpush.msra.mxu0 0.0
    %264 = vmatpush.msra.mxu0 0.0
    %265 = vmatpush.msra.mxu0 0.0
    %266 = vmatpush.msra.mxu0 0.0
    %267 = vmatpush.msra.mxu0 0.0
    %268 = vmatpush.msra.mxu0 0.0
    %269 = vmatpush.msra.mxu0 0.0
    %270 = vmatpush.msra.mxu0 0.0
    %v271 = vand.u32 %v101, 4294901760
    %v272 = vsub.f32 %v101, %v271
    %v273 = vand.u32 %v272, 4294901760
    %274 = vmatpush.msra.mxu0 %v273
    %v275 = vand.u32 %v100, 4294901760
    %v276 = vsub.f32 %v100, %v275
    %v277 = vand.u32 %v276, 4294901760
    %278 = vmatpush.msra.mxu0 %v277
    %v279 = vand.u32 %v99, 4294901760
    %v280 = vsub.f32 %v99, %v279
    %v281 = vand.u32 %v280, 4294901760
    %282 = vmatpush.msra.mxu0 %v281
    %v283 = vand.u32 %v98, 4294901760
    %v284 = vsub.f32 %v98, %v283
    %v285 = vand.u32 %v284, 4294901760
    %286 = vmatpush.msra.mxu0 %v285
    %v287 = vand.u32 %v104, 4294901760
    %288 = vmatmul.f32.gmra.mxu0 %v287
    %v289 = vpop.f32.mrf.mxu0
    %v290 = vadd.f32 %v251, %v289
    %v291 = vand.u32 %v107, 4294901760
    %292 = vmatmul.f32.gmra.mxu0 %v291
    %v293 = vpop.f32.mrf.mxu0
    %v294 = vadd.f32 %v257, %v293
    %295 = vdwg.mxu0
    %296 = vmatpush.msra.mxu0 0.0
    %297 = vmatpush.msra.mxu0 0.0
    %298 = vmatpush.msra.mxu0 0.0
    %299 = vmatpush.msra.mxu0 0.0
    %300 = vmatpush.msra.mxu0 0.0
    %301 = vmatpush.msra.mxu0 0.0
    %302 = vmatpush.msra.mxu0 0.0
    %303 = vmatpush.msra.mxu0 0.0
    %304 = vmatpush.msra.mxu0 0.0
    %305 = vmatpush.msra.mxu0 0.0
    %306 = vmatpush.msra.mxu0 0.0
    %307 = vmatpush.msra.mxu0 0.0
    %v308 = vand.u32 %v101, 4294901760
    %309 = vmatpush.msra.mxu0 %v308
    %v310 = vand.u32 %v100, 4294901760
    %311 = vmatpush.msra.mxu0 %v310
    %v312 = vand.u32 %v99, 4294901760
    %313 = vmatpush.msra.mxu0 %v312
    %v314 = vand.u32 %v98, 4294901760
    %315 = vmatpush.msra.mxu0 %v314
    %v316 = vand.u32 %v104, 4294901760
    %317 = vmatmul.f32.gmra.mxu0 %v316
    %v318 = vpop.f32.mrf.mxu0
    %v319 = vadd.f32 %v290, %v318
    %v320 = vand.u32 %v107, 4294901760
    %321 = vmatmul.f32.gmra.mxu0 %v320
    %v322 = vpop.f32.mrf.mxu0
    %v323 = vadd.f32 %v294, %v322
    %324 = vdwg.mxu0
    %v326 = vsel %vm102, %v90, 0
    %v329 = vsel %vm102, %v91, 0
    %331 = vmatpush.msra.mxu0 0.0
    %332 = vmatpush.msra.mxu0 0.0
    %333 = vmatpush.msra.mxu0 0.0
    %334 = vmatpush.msra.mxu0 0.0
    %335 = vmatpush.msra.mxu0 0.0
    %336 = vmatpush.msra.mxu0 0.0
    %337 = vmatpush.msra.mxu0 0.0
    %338 = vmatpush.msra.mxu0 0.0
    %339 = vmatpush.msra.mxu0 0.0
    %340 = vmatpush.msra.mxu0 0.0
    %341 = vmatpush.msra.mxu0 0.0
    %342 = vmatpush.msra.mxu0 0.0
    %v343 = vand.u32 %v97, 4294901760
    %344 = vmatpush.msra.mxu0 %v343
    %v345 = vand.u32 %v96, 4294901760
    %346 = vmatpush.msra.mxu0 %v345
    %v347 = vand.u32 %v95, 4294901760
    %348 = vmatpush.msra.mxu0 %v347
    %v349 = vand.u32 %v94, 4294901760
    %350 = vmatpush.msra.mxu0 %v349
    %v351 = vand.u32 %v326, 4294901760
    %v352 = vsub.f32 %v326, %v351
    %v353 = vand.u32 %v352, 4294901760
    %v354 = vsub.f32 %v352, %v353
    %v355 = vand.u32 %v354, 4294901760
    %356 = vmatmul.f32.gmra.mxu0 %v355
    %v357 = vpop.f32.mrf.mxu0
    %v358 = vadd.f32 %v319, %v357
    %v359 = vand.u32 %v329, 4294901760
    %v360 = vsub.f32 %v329, %v359
    %v361 = vand.u32 %v360, 4294901760
    %v362 = vsub.f32 %v360, %v361
    %v363 = vand.u32 %v362, 4294901760
    %364 = vmatmul.f32.gmra.mxu0 %v363
    %v365 = vpop.f32.mrf.mxu0
    %v366 = vadd.f32 %v323, %v365
    %367 = vdwg.mxu0
    %368 = vmatpush.msra.mxu0 0.0
    %369 = vmatpush.msra.mxu0 0.0
    %370 = vmatpush.msra.mxu0 0.0
    %371 = vmatpush.msra.mxu0 0.0
    %372 = vmatpush.msra.mxu0 0.0
    %373 = vmatpush.msra.mxu0 0.0
    %374 = vmatpush.msra.mxu0 0.0
    %375 = vmatpush.msra.mxu0 0.0
    %376 = vmatpush.msra.mxu0 0.0
    %377 = vmatpush.msra.mxu0 0.0
    %378 = vmatpush.msra.mxu0 0.0
    %379 = vmatpush.msra.mxu0 0.0
    %v380 = vand.u32 %v97, 4294901760
    %v381 = vsub.f32 %v97, %v380
    %v382 = vand.u32 %v381, 4294901760
    %v383 = vsub.f32 %v381, %v382
    %v384 = vand.u32 %v383, 4294901760
    %385 = vmatpush.msra.mxu0 %v384
    %v386 = vand.u32 %v96, 4294901760
    %v387 = vsub.f32 %v96, %v386
    %v388 = vand.u32 %v387, 4294901760
    %v389 = vsub.f32 %v387, %v388
    %v390 = vand.u32 %v389, 4294901760
    %391 = vmatpush.msra.mxu0 %v390
    %v392 = vand.u32 %v95, 4294901760
    %v393 = vsub.f32 %v95, %v392
    %v394 = vand.u32 %v393, 4294901760
    %v395 = vsub.f32 %v393, %v394
    %v396 = vand.u32 %v395, 4294901760
    %397 = vmatpush.msra.mxu0 %v396
    %v398 = vand.u32 %v94, 4294901760
    %v399 = vsub.f32 %v94, %v398
    %v400 = vand.u32 %v399, 4294901760
    %v401 = vsub.f32 %v399, %v400
    %v402 = vand.u32 %v401, 4294901760
    %403 = vmatpush.msra.mxu0 %v402
    %v404 = vand.u32 %v326, 4294901760
    %405 = vmatmul.f32.gmra.mxu0 %v404
    %v406 = vpop.f32.mrf.mxu0
    %v407 = vadd.f32 %v358, %v406
    %v408 = vand.u32 %v329, 4294901760
    %409 = vmatmul.f32.gmra.mxu0 %v408
    %v410 = vpop.f32.mrf.mxu0
    %v411 = vadd.f32 %v366, %v410
    %412 = vdwg.mxu0
    %413 = vmatpush.msra.mxu0 0.0
    %414 = vmatpush.msra.mxu0 0.0
    %415 = vmatpush.msra.mxu0 0.0
    %416 = vmatpush.msra.mxu0 0.0
    %417 = vmatpush.msra.mxu0 0.0
    %418 = vmatpush.msra.mxu0 0.0
    %419 = vmatpush.msra.mxu0 0.0
    %420 = vmatpush.msra.mxu0 0.0
    %421 = vmatpush.msra.mxu0 0.0
    %422 = vmatpush.msra.mxu0 0.0
    %423 = vmatpush.msra.mxu0 0.0
    %424 = vmatpush.msra.mxu0 0.0
    %v425 = vand.u32 %v97, 4294901760
    %v426 = vsub.f32 %v97, %v425
    %427 = vmatpush.msra.mxu0 %v426
    %v428 = vand.u32 %v96, 4294901760
    %v429 = vsub.f32 %v96, %v428
    %430 = vmatpush.msra.mxu0 %v429
    %v431 = vand.u32 %v95, 4294901760
    %v432 = vsub.f32 %v95, %v431
    %433 = vmatpush.msra.mxu0 %v432
    %v434 = vand.u32 %v94, 4294901760
    %v435 = vsub.f32 %v94, %v434
    %436 = vmatpush.msra.mxu0 %v435
    %v437 = vand.u32 %v326, 4294901760
    %v438 = vsub.f32 %v326, %v437
    %439 = vmatmul.f32.gmra.mxu0 %v438
    %v440 = vpop.f32.mrf.mxu0
    %v441 = vadd.f32 %v407, %v440
    %v442 = vand.u32 %v329, 4294901760
    %v443 = vsub.f32 %v329, %v442
    %444 = vmatmul.f32.gmra.mxu0 %v443
    %v445 = vpop.f32.mrf.mxu0
    %v446 = vadd.f32 %v411, %v445
    %447 = vdwg.mxu0
    %448 = vmatpush.msra.mxu0 0.0
    %449 = vmatpush.msra.mxu0 0.0
    %450 = vmatpush.msra.mxu0 0.0
    %451 = vmatpush.msra.mxu0 0.0
    %452 = vmatpush.msra.mxu0 0.0
    %453 = vmatpush.msra.mxu0 0.0
    %454 = vmatpush.msra.mxu0 0.0
    %455 = vmatpush.msra.mxu0 0.0
    %456 = vmatpush.msra.mxu0 0.0
    %457 = vmatpush.msra.mxu0 0.0
    %458 = vmatpush.msra.mxu0 0.0
    %459 = vmatpush.msra.mxu0 0.0
    %v460 = vand.u32 %v97, 4294901760
    %461 = vmatpush.msra.mxu0 %v460
    %v462 = vand.u32 %v96, 4294901760
    %463 = vmatpush.msra.mxu0 %v462
    %v464 = vand.u32 %v95, 4294901760
    %465 = vmatpush.msra.mxu0 %v464
    %v466 = vand.u32 %v94, 4294901760
    %467 = vmatpush.msra.mxu0 %v466
    %v468 = vand.u32 %v326, 4294901760
    %v469 = vsub.f32 %v326, %v468
    %v470 = vand.u32 %v469, 4294901760
    %471 = vmatmul.f32.gmra.mxu0 %v470
    %v472 = vpop.f32.mrf.mxu0
    %v473 = vadd.f32 %v441, %v472
    %v474 = vand.u32 %v329, 4294901760
    %v475 = vsub.f32 %v329, %v474
    %v476 = vand.u32 %v475, 4294901760
    %477 = vmatmul.f32.gmra.mxu0 %v476
    %v478 = vpop.f32.mrf.mxu0
    %v479 = vadd.f32 %v446, %v478
    %480 = vdwg.mxu0
    %481 = vmatpush.msra.mxu0 0.0
    %482 = vmatpush.msra.mxu0 0.0
    %483 = vmatpush.msra.mxu0 0.0
    %484 = vmatpush.msra.mxu0 0.0
    %485 = vmatpush.msra.mxu0 0.0
    %486 = vmatpush.msra.mxu0 0.0
    %487 = vmatpush.msra.mxu0 0.0
    %488 = vmatpush.msra.mxu0 0.0
    %489 = vmatpush.msra.mxu0 0.0
    %490 = vmatpush.msra.mxu0 0.0
    %491 = vmatpush.msra.mxu0 0.0
    %492 = vmatpush.msra.mxu0 0.0
    %v493 = vand.u32 %v97, 4294901760
    %v494 = vsub.f32 %v97, %v493
    %v495 = vand.u32 %v494, 4294901760
    %496 = vmatpush.msra.mxu0 %v495
    %v497 = vand.u32 %v96, 4294901760
    %v498 = vsub.f32 %v96, %v497
    %v499 = vand.u32 %v498, 4294901760
    %500 = vmatpush.msra.mxu0 %v499
    %v501 = vand.u32 %v95, 4294901760
    %v502 = vsub.f32 %v95, %v501
    %v503 = vand.u32 %v502, 4294901760
    %504 = vmatpush.msra.mxu0 %v503
    %v505 = vand.u32 %v94, 4294901760
    %v506 = vsub.f32 %v94, %v505
    %v507 = vand.u32 %v506, 4294901760
    %508 = vmatpush.msra.mxu0 %v507
    %v509 = vand.u32 %v326, 4294901760
    %510 = vmatmul.f32.gmra.mxu0 %v509
    %v511 = vpop.f32.mrf.mxu0
    %v512 = vadd.f32 %v473, %v511
    %v513 = vand.u32 %v329, 4294901760
    %514 = vmatmul.f32.gmra.mxu0 %v513
    %v515 = vpop.f32.mrf.mxu0
    %v516 = vadd.f32 %v479, %v515
    %517 = vdwg.mxu0
    %518 = vmatpush.msra.mxu0 0.0
    %519 = vmatpush.msra.mxu0 0.0
    %520 = vmatpush.msra.mxu0 0.0
    %521 = vmatpush.msra.mxu0 0.0
    %522 = vmatpush.msra.mxu0 0.0
    %523 = vmatpush.msra.mxu0 0.0
    %524 = vmatpush.msra.mxu0 0.0
    %525 = vmatpush.msra.mxu0 0.0
    %526 = vmatpush.msra.mxu0 0.0
    %527 = vmatpush.msra.mxu0 0.0
    %528 = vmatpush.msra.mxu0 0.0
    %529 = vmatpush.msra.mxu0 0.0
    %v530 = vand.u32 %v97, 4294901760
    %531 = vmatpush.msra.mxu0 %v530
    %v532 = vand.u32 %v96, 4294901760
    %533 = vmatpush.msra.mxu0 %v532
    %v534 = vand.u32 %v95, 4294901760
    %535 = vmatpush.msra.mxu0 %v534
    %v536 = vand.u32 %v94, 4294901760
    %537 = vmatpush.msra.mxu0 %v536
    %v538 = vand.u32 %v326, 4294901760
    %539 = vmatmul.f32.gmra.mxu0 %v538
    %v540 = vpop.f32.mrf.mxu0
    %v541 = vadd.f32 %v512, %v540
    %v542 = vand.u32 %v329, 4294901760
    %543 = vmatmul.f32.gmra.mxu0 %v542
    %v544 = vpop.f32.mrf.mxu0
    %v545 = vadd.f32 %v516, %v544
    %546 = vdwg.mxu0
    %v547 = vld [vmem:[%s4] sm:$0x1]
    %v549 = vperm.slane %v547, 0
    %v551 = vadd.f32 %v541, %v549
    %v552 = vadd.f32 %v545, %v549
    %v553 = vxor.u32 %v551, 2147483648
    %v554 = vxor.u32 %v552, 2147483648
    %v555 = vmul.f32 %v553, 1.442695
    %v556 = vpow.pop %v555
    %v557 = vmul.f32 %v554, 1.442695
    %v558 = vpow.pop %v557
    %v559 = vadd.f32 %v556, 1.0
    %v560 = vadd.f32 %v558, 1.0
    %v561 = vrcp.pop %v559
    %v562 = vmul.f32 %v559, %v561
    %v563 = vsub.f32 1.0, %v562
    %v564 = vmul.f32 %v561, %v563
    %v565 = vadd.f32 %v561, %v564
    %vm566 = vweird.f32 %v559
    %vm567 = vweird.f32 %v561
    %vm568 = vmor %vm566, %vm567
    %v569 = vsel %vm568, %v561, %v565
    %v570 = vand.u32 2147483647, %v559
    %vm571 = vcmp.eq.f32.partialorder %v570, 8.507059e+37
    %v572 = vand.u32 %v559, 2147483648
    %v573 = vor.u32 1.1754944e-38, %v572
    %v574 = vsel %vm571, %v573, %v569
    %v575 = vmul.f32 1.0, %v574
    %v576 = vrcp.pop %v560
    %v577 = vmul.f32 %v560, %v576
    %v578 = vsub.f32 1.0, %v577
    %v579 = vmul.f32 %v576, %v578
    %v580 = vadd.f32 %v576, %v579
    %vm581 = vweird.f32 %v560
    %vm582 = vweird.f32 %v576
    %vm583 = vmor %vm581, %vm582
    %v584 = vsel %vm583, %v576, %v580
    %v585 = vand.u32 2147483647, %v560
    %vm586 = vcmp.eq.f32.partialorder %v585, 8.507059e+37
    %v587 = vand.u32 %v560, 2147483648
    %v588 = vor.u32 1.1754944e-38, %v587
    %v589 = vsel %vm586, %v588, %v584
    %v590 = vmul.f32 1.0, %v589
    %v591 = vsub.f32 %v90, %v92
    %v592 = vsub.f32 %v91, %v93
    %v593 = vmul.f32 %v575, %v591
    %v594 = vmul.f32 %v590, %v592
    %v595 = vadd.f32 %v92, %v593
    %v596 = vadd.f32 %v93, %v594
    %v597 = vsel %vm102, %v595, 0.0
    %598 = vadd.xlane.f32.xlu0 %v597
    %v599 = vpop.xlane.xlu0 %598
    %v600 = vsel %vm102, %v596, 0.0
    %601 = vadd.xlane.f32.xlu0 %v600
    %v602 = vpop.xlane.xlu0 %601
    %v603 = vmul.f32 %v599, 0.03125
    %v604 = vmul.f32 %v602, 0.03125
    %v605 = vmul.f32 %v595, %v595
    %v606 = vmul.f32 %v596, %v596
    %v607 = vsel %vm102, %v605, 0.0
    %608 = vadd.xlane.f32.xlu0 %v607
    %v609 = vpop.xlane.xlu0 %608
    %v610 = vsel %vm102, %v606, 0.0
    %611 = vadd.xlane.f32.xlu0 %v610
    %v612 = vpop.xlane.xlu0 %611
    %v613 = vmul.f32 %v609, 0.03125
    %v614 = vmul.f32 %v612, 0.03125
    %v615 = vmul.f32 %v603, %v603
    %v616 = vmul.f32 %v604, %v604
    %v617 = vsub.f32 %v613, %v615
    %v618 = vsub.f32 %v614, %v616
    %v619 = vmax.f32 %v617, 0.0
    %v620 = vmax.f32 %v618, 0.0
    %v621 = vsub.f32 %v595, %v603
    %v622 = vsub.f32 %v596, %v604
    %v623 = vadd.f32 %v619, 1e-05
    %v624 = vadd.f32 %v620, 1e-05
    %v625 = vrsqrt.pop %v623
    %v626 = vmul.f32 %v625, %v623
    %v627 = vmul.f32 %v626, %v625
    %v628 = vmul.f32 0.5, %v627
    %v629 = vsub.f32 1.5, %v628
    %v630 = vmul.f32 %v625, %v629
    %vm631 = vweird.f32 %v623
    %vm632 = vweird.f32 %v625
    %vm633 = vmor %vm631, %vm632
    %v634 = vsel %vm633, %v625, %v630
    %v635 = vrsqrt.pop %v624
    %v636 = vmul.f32 %v635, %v624
    %v637 = vmul.f32 %v636, %v635
    %v638 = vmul.f32 0.5, %v637
    %v639 = vsub.f32 1.5, %v638
    %v640 = vmul.f32 %v635, %v639
    %vm641 = vweird.f32 %v624
    %vm642 = vweird.f32 %v635
    %vm643 = vmor %vm641, %vm642
    %v644 = vsel %vm643, %v635, %v640
    %v645 = vmul.f32 %v621, %v634
    %v646 = vmul.f32 %v622, %v644
    %v647 = vld [vmem:[%s5] sm:$0x1]
    %v649 = vperm.slane %v647, 0
    %v651 = vmul.f32 %v645, %v649
    %v652 = vmul.f32 %v646, %v649
    %v653 = vld [vmem:[%s6] sm:$0x1]
    %v655 = vperm.slane %v653, 0
    %v657 = vadd.f32 %v651, %v655
    %v658 = vadd.f32 %v652, %v655
    %659 = vst.msk [vmem:[#allocation10] sm:$0xff] %vm102, %v657
    %660 = vst.msk [vmem:[#allocation10 + $0x8] sm:$0xff] %vm102, %v658
    // Predicated region
    $region46: #{_dynamic_gating_impl.1} parent=1 // pred_check
      _
    $region47: #{_dynamic_gating_impl.1} parent=1 // pred_check_branch
      %662 = sbr.rel (0) target = $region49
    $region48: #{_dynamic_gating_impl.1} parent=1 // pred_region
      %664 = vsyncadd [#allocation4], 0
      %s665 = sshll.u32 [#allocation10], 4
      %s666 = int_to_ptr.vmem [resolvable:$true] %s665
      %s667 = sshll.u32 %s7, 4
      %s668 = int_to_ptr.hbm [resolvable:$true] %s667
      %673 = dma.vmem_to_hbm [thread:$0]  %s666, 256, %s668, [#allocation4], 128, 128, 8
    $region49: #{_dynamic_gating_impl.1} parent=1 // pred_fallthru
      _
    // Predicated region
    $region50: #{_dynamic_gating_impl.1} parent=1 // pred_check
      _
    $region51: #{_dynamic_gating_impl.1} parent=1 // pred_check_branch
      %675 = sbr.rel (0) target = $region53
    $region52: #{_dynamic_gating_impl.1} parent=1 // pred_region
      %677 = dma.done [#allocation4], 256
    $region53: #{_dynamic_gating_impl.1} parent=1 // pred_fallthru
      _
    %678 = vsyncpa [#allocation3], 1
    %679 = vsyncpa [#allocation6], 1
    %680 = vsyncpa [#allocation9], 1
    %681 = vsyncpa [#allocation4], 1

</llo_original>
